<compile_context>
chip_gen: v7x
topology: tpu7x:2x2x1
jax: 0.10.0
libtpu: 0.0.40
codegen_flags: <defaults>
</compile_context>

<pallas_src>
import jax
import jax.numpy as jnp
from jax import lax
from jax.experimental import pallas as pl
from jax.experimental.pallas import tpu as pltpu


# ----------------------------------------------------------------------------
# Fused Pallas kernels
# ----------------------------------------------------------------------------
def _make_fused_direct_kernel(num_blocks):
    """Kernel refs: (a, x, w_t[0..B-1], out[0..B-1]).

    Per block i:  h{1,2} = x{1,2} @ W_i^T ;  y1 = A @ h1 ;  y2 = A^T @ h2
                  tanh on all but the last block;  out_i = concat(y1, y2).
    """

    def kernel(*refs):
        a_ref = refs[0]
        x_ref = refs[1]
        w_refs = refs[2:2 + num_blocks]
        out_refs = refs[2 + num_blocks:]

        a = a_ref[...].astype(jnp.float32)          # (N, N), loaded once
        x1 = x_ref[...].astype(jnp.float32)
        x2 = x1

        for i in range(num_blocks):
            w_t = w_refs[i][...].astype(jnp.float32)  # (Din_i, Dout_i)
            # H = X @ W^T  (nn.Linear, bias=False).  Block 0: x1 == x2.
            h1 = jnp.dot(x1, w_t, preferred_element_type=jnp.float32)
            if i == 0:
                h2 = h1
            else:
                h2 = jnp.dot(x2, w_t, preferred_element_type=jnp.float32)

            # Forward direction: Y1 = A_hat @ H1
            y1 = jnp.dot(a, h1, preferred_element_type=jnp.float32)
            # Reverse direction: Y2 = A_hat^T @ H2 without materializing A^T
            # (contract A's row dim with H2's row dim).
            y2 = lax.dot_general(
                a, h2,
                dimension_numbers=(((0,), (0,)), ((), ())),
                preferred_element_type=jnp.float32)

            if i != num_blocks - 1:                  # last block: no activation
                y1 = jnp.tanh(y1)
                y2 = jnp.tanh(y2)

            out_ref = out_refs[i]
            out_ref[...] = jnp.concatenate((y1, y2), axis=1).astype(out_ref.dtype)

            x1, x2 = y1, y2

    return kernel


def _make_fused_undirect_kernel(num_blocks):
    """Kernel refs: (a, x, w_t[0..B-1], out[0..B-1])."""

    def kernel(*refs):
        a_ref = refs[0]
        x_ref = refs[1]
        w_refs = refs[2:2 + num_blocks]
        out_refs = refs[2 + num_blocks:]

        a = a_ref[...].astype(jnp.float32)
        x = x_ref[...].astype(jnp.float32)
        for i in range(num_blocks):
            w_t = w_refs[i][...].astype(jnp.float32)
            h = jnp.dot(x, w_t, preferred_element_type=jnp.float32)
            y = jnp.dot(a, h, preferred_element_type=jnp.float32)
            if i != num_blocks - 1:
                y = jnp.tanh(y)
            out_refs[i][...] = y.astype(out_refs[i].dtype)
            x = y

    return kernel


_COMPILER_PARAMS = pltpu.CompilerParams(vmem_limit_bytes=32 * 1024 * 1024)


def fused_forward_direct(a_hat, x, weights_t):
    """Whole direct-mode forward in one pallas_call.

    a_hat: (N, N)  x: (N, Din)  weights_t[i]: (Din_i, Dout_i)  (pre-transposed)
    Returns list of per-block concatenated outputs [(N, 2*Dout_i), ...].
    """
    n = a_hat.shape[0]
    num_blocks = len(weights_t)
    out_shapes = tuple(
        jax.ShapeDtypeStruct((n, 2 * w.shape[1]), x.dtype) for w in weights_t)
    outs = pl.pallas_call(
        _make_fused_direct_kernel(num_blocks),
        out_shape=out_shapes,
        compiler_params=_COMPILER_PARAMS,
    )(a_hat, x, *weights_t)
    return list(outs)


def fused_forward_undirect(a_hat, x, weights_t):
    n = a_hat.shape[0]
    num_blocks = len(weights_t)
    out_shapes = tuple(
        jax.ShapeDtypeStruct((n, w.shape[1]), x.dtype) for w in weights_t)
    outs = pl.pallas_call(
        _make_fused_undirect_kernel(num_blocks),
        out_shape=out_shapes,
        compiler_params=_COMPILER_PARAMS,
    )(a_hat, x, *weights_t)
    return list(outs)


# ----------------------------------------------------------------------------
# EM_GCN model, parameters initialized deterministically
# ----------------------------------------------------------------------------
class EMGCNPallas:
    def __init__(self, num_gcn_blocks, output_dim, source_feats, target_feats,
                 direct=True, key=None):
        self.num_gcn_blocks = num_gcn_blocks
        self.direct = direct
        self.source_feats = source_feats
        self.target_feats = target_feats

        # Deterministic Xavier-uniform-like init (tanh gain), synthetic weights.
        if key is None:
            key = jax.random.PRNGKey(0)
        self.weights = []      # (Dout, Din) — PyTorch nn.Linear convention
        self.weights_t = []    # (Din, Dout) — pre-transposed ONCE for the MXU
        input_dim = source_feats.shape[1]
        for _ in range(num_gcn_blocks):
            key, sub = jax.random.split(key)
            gain = 5.0 / 3.0
            limit = gain * jnp.sqrt(6.0 / (input_dim + output_dim))
            w = jax.random.uniform(
                sub, (output_dim, input_dim), dtype=jnp.float32,
                minval=-limit, maxval=limit)
            self.weights.append(w)
            self.weights_t.append(jnp.asarray(w.T))   # materialize transpose once
            input_dim = output_dim

    def forward_direct(self, a_hat, emb_input):
        block_outs = fused_forward_direct(a_hat, emb_input, self.weights_t)
        return [emb_input] + block_outs

    def forward_undirect(self, a_hat, emb_input):
        block_outs = fused_forward_undirect(a_hat, emb_input, self.weights_t)
        return [emb_input] + block_outs

    def __call__(self, a_hat, net='s'):
        feats = self.source_feats if net == 's' else self.target_feats
        emb_input = feats  # .clone() equivalent (JAX arrays are immutable)
        if self.direct:
            return self.forward_direct(a_hat, emb_input)
        return self.forward_undirect(a_hat, emb_input)


# ----------------------------------------------------------------------------
# Pure-JAX references for sanity checking
# ----------------------------------------------------------------------------
def _ref_forward_direct(a_hat, emb_input, weights):
    outputs = [emb_input]
    x1 = x2 = emb_input
    n_blocks = len(weights)
    for i, w in enumerate(weights):
        y1 = a_hat @ (x1 @ w.T)
        y2 = a_hat.T @ (x2 @ w.T)
        if i != n_blocks - 1:
            y1, y2 = jnp.tanh(y1), jnp.tanh(y2)
        outputs.append(jnp.concatenate((y1, y2), axis=1))
        x1, x2 = y1, y2
    return outputs


def _ref_forward_undirect(a_hat, emb_input, weights):
    outputs = [emb_input]
    x = emb_input
    n_blocks = len(weights)
    for i, w in enumerate(weights):
        y = a_hat @ (x @ w.T)
        if i != n_blocks - 1:
            y = jnp.tanh(y)
        outputs.append(y)
        x = y
    return outputs


if __name__ == "__main__":
    key = jax.random.PRNGKey(0)
    k_a, k_sf, k_tf, k_w = jax.random.split(key, 4)

    num_nodes = 16        # small node count
    feat_dim = 32         # input feature dimension
    output_dim = 32       # GCN output dimension per block
    num_gcn_blocks = 2

    # Dense normalized-adjacency stand-in for the sparse Laplacian.
    a_hat = jax.random.uniform(k_a, (num_nodes, num_nodes), dtype=jnp.float32)
    a_hat = a_hat / jnp.sum(a_hat, axis=1, keepdims=True)

    source_feats = jax.random.normal(k_sf, (num_nodes, feat_dim), jnp.float32)
    target_feats = jax.random.normal(k_tf, (num_nodes, feat_dim), jnp.float32)

    # ---- direct mode ----
    model = EMGCNPallas(num_gcn_blocks, output_dim, source_feats, target_feats,
                        direct=True, key=k_w)
    outputs = model(a_hat, net='s')
    outputs = [jax.block_until_ready(o) for o in outputs]

    ref_outputs = _ref_forward_direct(a_hat, source_feats, model.weights)
    for got, ref in zip(outputs, ref_outputs):
        assert got.shape == ref.shape
        assert jnp.allclose(got, ref, atol=1e-4, rtol=1e-4)

    # ---- undirect mode (same weights: same key) ----
    model_u = EMGCNPallas(num_gcn_blocks, output_dim, source_feats,
                          target_feats, direct=False, key=k_w)
    outputs_u = model_u(a_hat, net='t')
    outputs_u = [jax.block_until_ready(o) for o in outputs_u]

    ref_outputs_u = _ref_forward_undirect(a_hat, target_feats, model_u.weights)
    for got, ref in zip(outputs_u, ref_outputs_u):
        assert got.shape == ref.shape
        assert jnp.allclose(got, ref, atol=1e-4, rtol=1e-4)

    print("KERNEL_OK")
</pallas_src>

<mosaic_0001>
module attributes {stable_mosaic.version = 11 : i64} {
  func.func @kernel(%arg0: memref<16x16xf32, #tpu.memory_space<vmem>>, %arg1: memref<16x32xf32, #tpu.memory_space<vmem>>, %arg2: memref<32x32xf32, #tpu.memory_space<vmem>>, %arg3: memref<32x32xf32, #tpu.memory_space<vmem>>, %arg4: memref<16x64xf32, #tpu.memory_space<vmem>>, %arg5: memref<16x64xf32, #tpu.memory_space<vmem>>) attributes {dimension_semantics = [], scalar_prefetch = 0 : i64, scratch_operands = 0 : i64, tpu.core_type = #tpu.core_type<tc>} {
    %c0 = arith.constant 0 : index
    %c0_0 = arith.constant 0 : index
    %0 = vector.load %arg0[%c0, %c0_0] : memref<16x16xf32, #tpu.memory_space<vmem>>, vector<16x16xf32>
    %c0_1 = arith.constant 0 : index
    %c0_2 = arith.constant 0 : index
    %1 = vector.load %arg1[%c0_1, %c0_2] : memref<16x32xf32, #tpu.memory_space<vmem>>, vector<16x32xf32>
    %c0_3 = arith.constant 0 : index
    %c0_4 = arith.constant 0 : index
    %2 = vector.load %arg2[%c0_3, %c0_4] : memref<32x32xf32, #tpu.memory_space<vmem>>, vector<32x32xf32>
    %cst = arith.constant dense<0.000000e+00> : vector<16x32xf32>
    %3 = tpu.matmul %1, %2, %cst {dimension_numbers = #tpu.dot_dimension_numbers<[1], [0], [0], [1], [0, 0, 1, 1], [], []>} : vector<16x32xf32>, vector<32x32xf32>, vector<16x32xf32> -> vector<16x32xf32>
    %cst_5 = arith.constant dense<0.000000e+00> : vector<16x32xf32>
    %4 = tpu.matmul %0, %3, %cst_5 {dimension_numbers = #tpu.dot_dimension_numbers<[1], [0], [0], [1], [0, 0, 1, 1], [], []>} : vector<16x16xf32>, vector<16x32xf32>, vector<16x32xf32> -> vector<16x32xf32>
    %cst_6 = arith.constant dense<0.000000e+00> : vector<16x32xf32>
    %5 = tpu.matmul %0, %3, %cst_6 {dimension_numbers = #tpu.dot_dimension_numbers<[0], [0], [1], [1], [0, 1, 1, 1], [], []>} : vector<16x16xf32>, vector<16x32xf32>, vector<16x32xf32> -> vector<16x32xf32>
    %6 = math.tanh %4 : vector<16x32xf32>
    %7 = math.tanh %5 : vector<16x32xf32>
    %8 = tpu.concatenate %6, %7 in 1 : vector<16x32xf32>, vector<16x32xf32> -> vector<16x64xf32>
    %c0_7 = arith.constant 0 : index
    %c0_8 = arith.constant 0 : index
    %9 = vector.load %arg4[%c0_7, %c0_8] : memref<16x64xf32, #tpu.memory_space<vmem>>, vector<16x64xf32>
    tpu.vector_store %arg4[%c0_7, %c0_8], %8 {strides = array<i32>} : memref<16x64xf32, #tpu.memory_space<vmem>>, vector<16x64xf32>,
    %c0_9 = arith.constant 0 : index
    %c0_10 = arith.constant 0 : index
    %10 = vector.load %arg3[%c0_9, %c0_10] : memref<32x32xf32, #tpu.memory_space<vmem>>, vector<32x32xf32>
    %cst_11 = arith.constant dense<0.000000e+00> : vector<16x32xf32>
    %11 = tpu.matmul %6, %10, %cst_11 {dimension_numbers = #tpu.dot_dimension_numbers<[1], [0], [0], [1], [0, 0, 1, 1], [], []>} : vector<16x32xf32>, vector<32x32xf32>, vector<16x32xf32> -> vector<16x32xf32>
    %cst_12 = arith.constant dense<0.000000e+00> : vector<16x32xf32>
    %12 = tpu.matmul %7, %10, %cst_12 {dimension_numbers = #tpu.dot_dimension_numbers<[1], [0], [0], [1], [0, 0, 1, 1], [], []>} : vector<16x32xf32>, vector<32x32xf32>, vector<16x32xf32> -> vector<16x32xf32>
    %cst_13 = arith.constant dense<0.000000e+00> : vector<16x32xf32>
    %13 = tpu.matmul %0, %11, %cst_13 {dimension_numbers = #tpu.dot_dimension_numbers<[1], [0], [0], [1], [0, 0, 1, 1], [], []>} : vector<16x16xf32>, vector<16x32xf32>, vector<16x32xf32> -> vector<16x32xf32>
    %cst_14 = arith.constant dense<0.000000e+00> : vector<16x32xf32>
    %14 = tpu.matmul %0, %12, %cst_14 {dimension_numbers = #tpu.dot_dimension_numbers<[0], [0], [1], [1], [0, 1, 1, 1], [], []>} : vector<16x16xf32>, vector<16x32xf32>, vector<16x32xf32> -> vector<16x32xf32>
    %15 = tpu.concatenate %13, %14 in 1 : vector<16x32xf32>, vector<16x32xf32> -> vector<16x64xf32>
    %c0_15 = arith.constant 0 : index
    %c0_16 = arith.constant 0 : index
    %16 = vector.load %arg5[%c0_15, %c0_16] : memref<16x64xf32, #tpu.memory_space<vmem>>, vector<16x64xf32>
    tpu.vector_store %arg5[%c0_15, %c0_16], %15 {strides = array<i32>} : memref<16x64xf32, #tpu.memory_space<vmem>>, vector<16x64xf32>,
    return
  }
}

</mosaic_0001>

<llo_original>
// kernel: tpu_custom_call.1
$region0: #{tpu_custom_call.1}
  #allocation0 [shape = 'u32[]', space=smem, size = 0x4, offset = 0x4, fixed_abs, tag = 'smem constant byte address 0x4 - core index']
  #allocation1 [shape = 'u32[144,128]{1,0:T(1,128)}', space=vmem, size = 0x12000, scoped, tag = 'internal scratch']
  %s0 = inlined_call_operand.hbm [shape: f32[16,16], index: 0, kind: input, shape index: {}]
  %s1 = inlined_call_operand.hbm [shape: f32[16,32], index: 1, kind: input, shape index: {}]
  %s2 = inlined_call_operand.hbm [shape: f32[32,32], index: 2, kind: input, shape index: {}]
  %s3 = inlined_call_operand.hbm [shape: f32[32,32], index: 3, kind: input, shape index: {}]
  %s4 = inlined_call_operand.hbm [shape: f32[16,64], index: 4, kind: output, shape index: {0}]
  %s5 = inlined_call_operand.hbm [shape: f32[16,64], index: 5, kind: output, shape index: {1}]
  %6 = xla_tuple %s4, %s5
  %s7 = sld [smem:[#allocation0]]
  $region50: #{tpu_custom_call.1} parent=0
    _
  %s9 = ssub.s32 1, %s7
  %s10 = scalar_select 0, %s9, %s7
  $region1: #{tpu_custom_call.1} parent=0
    #allocation2 [shape = 'u8[8192]{0}', space=vmem, size = 0x2000, scoped, tag = 'input window, operand 0, single buffered']
    #allocation3 [shape = 's32[1]{0}', space=sflag, size = 0x4, scoped, tag = 'scoped memory for tpu_custom_call.1']
    #allocation4 [shape = 's32[1]{0}', space=sflag, size = 0x4, scoped, tag = 'scoped memory for tpu_custom_call.1']
    #allocation5 [shape = 'u8[8192]{0}', space=vmem, size = 0x2000, scoped, tag = 'input window, operand 1, single buffered']
    #allocation6 [shape = 's32[1]{0}', space=sflag, size = 0x4, scoped, tag = 'scoped memory for tpu_custom_call.1']
    #allocation7 [shape = 'u8[16384]{0}', space=vmem, size = 0x4000, scoped, tag = 'input window, operand 2, single buffered']
    #allocation8 [shape = 'u8[16384]{0}', space=vmem, size = 0x4000, scoped, tag = 'input window, operand 3, single buffered']
    #allocation9 [shape = 's32[1]{0}', space=sflag, size = 0x4, scoped, tag = 'scoped memory for tpu_custom_call.1']
    #allocation10 [shape = 'u8[8192]{0}', space=vmem, size = 0x2000, scoped, tag = 'output window, operand 0, single buffered']
    #allocation11 [shape = 'u8[8192]{0}', space=vmem, size = 0x2000, scoped, tag = 'output window, operand 1, single buffered']
    #allocation12 [shape = 's32[1]{0}', space=sflag, size = 0x4, scoped, tag = 'scoped memory for tpu_custom_call.1']
    %11 = vsyncpa [#allocation3], 0
    %12 = vsyncpa [#allocation6], 0
    %13 = vsyncpa [#allocation9], 0
    %14 = vsyncpa [#allocation4], 0
    %15 = vsyncpa [#allocation12], 0
    // Predicated region
    $region2: #{tpu_custom_call.1} parent=1 // pred_check
      _
    $region3: #{tpu_custom_call.1} parent=1 // pred_check_branch
      %17 = sbr.rel (0) target = $region5
    $region4: #{tpu_custom_call.1} parent=1 // pred_region
      %s19 = ssub.s32 256, 256
      %20 = vsyncadd [#allocation3], %s19
      %s21 = sshll.u32 [#allocation2], 4
      %s22 = int_to_ptr.vmem [resolvable:$true] %s21
      %27 = dma.hbm_to_vmem [thread:$0]  %s0, 256, %s22, [#allocation3], 128, 128, 8
    $region5: #{tpu_custom_call.1} parent=1 // pred_fallthru
      _
    // Predicated region
    $region6: #{tpu_custom_call.1} parent=1 // pred_check
      _
    $region7: #{tpu_custom_call.1} parent=1 // pred_check_branch
      %29 = sbr.rel (0) target = $region9
    $region8: #{tpu_custom_call.1} parent=1 // pred_region
      %s31 = ssub.s32 256, 256
      %32 = vsyncadd [#allocation6], %s31
      %s33 = sshll.u32 [#allocation5], 4
      %s34 = int_to_ptr.vmem [resolvable:$true] %s33
      %39 = dma.hbm_to_vmem [thread:$0]  %s1, 256, %s34, [#allocation6], 128, 128, 8
    $region9: #{tpu_custom_call.1} parent=1 // pred_fallthru
      _
    // Predicated region
    $region10: #{tpu_custom_call.1} parent=1 // pred_check
      _
    $region11: #{tpu_custom_call.1} parent=1 // pred_check_branch
      %41 = sbr.rel (0) target = $region13
    $region12: #{tpu_custom_call.1} parent=1 // pred_region
      %s43 = ssub.s32 512, 512
      %44 = vsyncadd [#allocation6], %s43
      %s45 = sshll.u32 [#allocation7], 4
      %s46 = int_to_ptr.vmem [resolvable:$true] %s45
      %51 = dma.hbm_to_vmem [thread:$0]  %s2, 512, %s46, [#allocation6], 128, 128, 8
    $region13: #{tpu_custom_call.1} parent=1 // pred_fallthru
      _
    // Predicated region
    $region14: #{tpu_custom_call.1} parent=1 // pred_check
      _
    $region15: #{tpu_custom_call.1} parent=1 // pred_check_branch
      %53 = sbr.rel (0) target = $region17
    $region16: #{tpu_custom_call.1} parent=1 // pred_region
      %s55 = ssub.s32 512, 512
      %56 = vsyncadd [#allocation9], %s55
      %s57 = sshll.u32 [#allocation8], 4
      %s58 = int_to_ptr.vmem [resolvable:$true] %s57
      %63 = dma.hbm_to_vmem [thread:$0]  %s3, 512, %s58, [#allocation9], 128, 128, 8
    $region17: #{tpu_custom_call.1} parent=1 // pred_fallthru
      _
    // Predicated region
    $region18: #{tpu_custom_call.1} parent=1 // pred_check
      _
    $region19: #{tpu_custom_call.1} parent=1 // pred_check_branch
      %65 = sbr.rel (0) target = $region21
    $region20: #{tpu_custom_call.1} parent=1 // pred_region
      %66 = dma.done [#allocation3], 256
    $region21: #{tpu_custom_call.1} parent=1 // pred_fallthru
      _
    // Predicated region
    $region22: #{tpu_custom_call.1} parent=1 // pred_check
      _
    $region23: #{tpu_custom_call.1} parent=1 // pred_check_branch
      %68 = sbr.rel (0) target = $region25
    $region24: #{tpu_custom_call.1} parent=1 // pred_region
      %69 = dma.done [#allocation6], 256
    $region25: #{tpu_custom_call.1} parent=1 // pred_fallthru
      _
    // Predicated region
    $region26: #{tpu_custom_call.1} parent=1 // pred_check
      _
    $region27: #{tpu_custom_call.1} parent=1 // pred_check_branch
      %71 = sbr.rel (0) target = $region29
    $region28: #{tpu_custom_call.1} parent=1 // pred_region
      %72 = dma.done [#allocation6], 512
    $region29: #{tpu_custom_call.1} parent=1 // pred_fallthru
      _
    // Predicated region
    $region30: #{tpu_custom_call.1} parent=1 // pred_check
      _
    $region31: #{tpu_custom_call.1} parent=1 // pred_check_branch
      %74 = sbr.rel (0) target = $region33
    $region32: #{tpu_custom_call.1} parent=1 // pred_region
      %75 = dma.done [#allocation9], 512
    $region33: #{tpu_custom_call.1} parent=1 // pred_fallthru
      _
    %v76 = vld [vmem:[#allocation2] sm:$0xff]
    %v77 = vld [vmem:[#allocation2 + $0x8] sm:$0xff]
    %v78 = vld [vmem:[#allocation5] sm:$0xff]
    %v79 = vld [vmem:[#allocation5 + $0x8] sm:$0xff]
    %v80 = vld [vmem:[#allocation7] sm:$0xff]
    %v81 = vld [vmem:[#allocation7 + $0x8] sm:$0xff]
    %v82 = vld [vmem:[#allocation7 + $0x10] sm:$0xff]
    %v83 = vld [vmem:[#allocation7 + $0x18] sm:$0xff]
    %vm84 = vcmask 261120
    %v86 = vsel %vm84, %v78, 0
    %v89 = vsel %vm84, %v79, 0
    %91 = vmatprep.subr.mxu0 0.0
    %92 = vmatpush1.msra.mxu0 %v80
    %93 = vmatprep.subr.mxu0 0.0
    %94 = vmatpush1.msra.mxu0 %v81
    %95 = vmatprep.subr.mxu0 0.0
    %96 = vmatpush1.msra.mxu0 %v82
    %97 = vmatprep.subr.mxu0 0.0
    %98 = vmatpush1.msra.mxu0 %v83
    %99 = vmatprep.subr.mxu0 0.0
    %100 = vmatpush1.msra.mxu0 0.0
    %101 = vmatprep.subr.mxu0 0.0
    %102 = vmatpush1.msra.mxu0 0.0
    %103 = vmatprep.subr.mxu0 0.0
    %104 = vmatpush1.msra.mxu0 0.0
    %105 = vmatprep.subr.mxu0 0.0
    %106 = vmatpush1.msra.mxu0 0.0
    %107 = vmatprep.subr.mxu0 0.0
    %108 = vmatpush1.msra.mxu0 0.0
    %109 = vmatprep.subr.mxu0 0.0
    %110 = vmatpush1.msra.mxu0 0.0
    %111 = vmatprep.subr.mxu0 0.0
    %112 = vmatpush1.msra.mxu0 0.0
    %113 = vmatprep.subr.mxu0 0.0
    %114 = vmatpush1.msra.mxu0 0.0
    %115 = vmatprep.subr.mxu0 0.0
    %116 = vmatpush1.msra.mxu0 0.0
    %117 = vmatprep.subr.mxu0 0.0
    %118 = vmatpush1.msra.mxu0 0.0
    %119 = vmatprep.subr.mxu0 0.0
    %120 = vmatpush1.msra.mxu0 0.0
    %121 = vmatprep.subr.mxu0 0.0
    %122 = vmatpush1.msra.mxu0 0.0
    %123 = vmatprep.subr.mxu0 0.0
    %124 = vmatpush1.msra.mxu0 0.0
    %125 = vmatprep.subr.mxu0 0.0
    %126 = vmatpush1.msra.mxu0 0.0
    %127 = vmatprep.subr.mxu0 0.0
    %128 = vmatpush1.msra.mxu0 0.0
    %129 = vmatprep.subr.mxu0 0.0
    %130 = vmatpush1.msra.mxu0 0.0
    %131 = vmatprep.subr.mxu0 0.0
    %132 = vmatpush1.msra.mxu0 0.0
    %133 = vmatprep.subr.mxu0 0.0
    %134 = vmatpush1.msra.mxu0 0.0
    %135 = vmatprep.subr.mxu0 0.0
    %136 = vmatpush1.msra.mxu0 0.0
    %137 = vmatprep.subr.mxu0 0.0
    %138 = vmatpush1.msra.mxu0 0.0
    %139 = vmatprep.subr.mxu0 0.0
    %140 = vmatpush1.msra.mxu0 0.0
    %141 = vmatprep.subr.mxu0 0.0
    %142 = vmatpush1.msra.mxu0 0.0
    %143 = vmatprep.subr.mxu0 0.0
    %144 = vmatpush1.msra.mxu0 0.0
    %145 = vmatprep.subr.mxu0 0.0
    %146 = vmatpush1.msra.mxu0 0.0
    %147 = vmatprep.subr.mxu0 0.0
    %148 = vmatpush1.msra.mxu0 0.0
    %149 = vmatprep.subr.mxu0 0.0
    %150 = vmatpush1.msra.mxu0 0.0
    %151 = vmatprep.subr.mxu0 0.0
    %152 = vmatpush1.msra.mxu0 0.0
    %153 = vmatprep.subr.mxu0 0.0
    %154 = vmatpush1.msra.mxu0 0.0
    %155 = vmatprep.mubr.f32.mxu0 0.0
    %156 = vmatmul.mubr.f32.gmra.mrb[0].mxu0 %v86
    %v157 = vpop.f32.mrb[0].mxu0
    %v158 = vadd.f32 0.0, %v157
    %v159 = vpop.f32.mrb[0].mxu0
    %160 = vmatprep.mubr.f32.mxu0 0.0
    %161 = vmatmul.mubr.f32.gmra.mrb[0].mxu0 %v89
    %v162 = vpop.f32.mrb[0].mxu0
    %v163 = vadd.f32 0.0, %v162
    %v164 = vpop.f32.mrb[0].mxu0
    %165 = vdwg.mxu0
    %vm166 = vcmask 130048
    %v168 = vsel %vm166, %v76, 0
    %v171 = vsel %vm166, %v77, 0
    %173 = vmatprep.subr.mxu0 0.0
    %174 = vmatpush1.msra.mxu0 %v158
    %175 = vmatprep.subr.mxu0 0.0
    %176 = vmatpush1.msra.mxu0 %v163
    %177 = vmatprep.subr.mxu0 0.0
    %178 = vmatpush1.msra.mxu0 0.0
    %179 = vmatprep.subr.mxu0 0.0
    %180 = vmatpush1.msra.mxu0 0.0
    %181 = vmatprep.subr.mxu0 0.0
    %182 = vmatpush1.msra.mxu0 0.0
    %183 = vmatprep.subr.mxu0 0.0
    %184 = vmatpush1.msra.mxu0 0.0
    %185 = vmatprep.subr.mxu0 0.0
    %186 = vmatpush1.msra.mxu0 0.0
    %187 = vmatprep.subr.mxu0 0.0
    %188 = vmatpush1.msra.mxu0 0.0
    %189 = vmatprep.subr.mxu0 0.0
    %190 = vmatpush1.msra.mxu0 0.0
    %191 = vmatprep.subr.mxu0 0.0
    %192 = vmatpush1.msra.mxu0 0.0
    %193 = vmatprep.subr.mxu0 0.0
    %194 = vmatpush1.msra.mxu0 0.0
    %195 = vmatprep.subr.mxu0 0.0
    %196 = vmatpush1.msra.mxu0 0.0
    %197 = vmatprep.subr.mxu0 0.0
    %198 = vmatpush1.msra.mxu0 0.0
    %199 = vmatprep.subr.mxu0 0.0
    %200 = vmatpush1.msra.mxu0 0.0
    %201 = vmatprep.subr.mxu0 0.0
    %202 = vmatpush1.msra.mxu0 0.0
    %203 = vmatprep.subr.mxu0 0.0
    %204 = vmatpush1.msra.mxu0 0.0
    %205 = vmatprep.subr.mxu0 0.0
    %206 = vmatpush1.msra.mxu0 0.0
    %207 = vmatprep.subr.mxu0 0.0
    %208 = vmatpush1.msra.mxu0 0.0
    %209 = vmatprep.subr.mxu0 0.0
    %210 = vmatpush1.msra.mxu0 0.0
    %211 = vmatprep.subr.mxu0 0.0
    %212 = vmatpush1.msra.mxu0 0.0
    %213 = vmatprep.subr.mxu0 0.0
    %214 = vmatpush1.msra.mxu0 0.0
    %215 = vmatprep.subr.mxu0 0.0
    %216 = vmatpush1.msra.mxu0 0.0
    %217 = vmatprep.subr.mxu0 0.0
    %218 = vmatpush1.msra.mxu0 0.0
    %219 = vmatprep.subr.mxu0 0.0
    %220 = vmatpush1.msra.mxu0 0.0
    %221 = vmatprep.subr.mxu0 0.0
    %222 = vmatpush1.msra.mxu0 0.0
    %223 = vmatprep.subr.mxu0 0.0
    %224 = vmatpush1.msra.mxu0 0.0
    %225 = vmatprep.subr.mxu0 0.0
    %226 = vmatpush1.msra.mxu0 0.0
    %227 = vmatprep.subr.mxu0 0.0
    %228 = vmatpush1.msra.mxu0 0.0
    %229 = vmatprep.subr.mxu0 0.0
    %230 = vmatpush1.msra.mxu0 0.0
    %231 = vmatprep.subr.mxu0 0.0
    %232 = vmatpush1.msra.mxu0 0.0
    %233 = vmatprep.subr.mxu0 0.0
    %234 = vmatpush1.msra.mxu0 0.0
    %235 = vmatprep.subr.mxu0 0.0
    %236 = vmatpush1.msra.mxu0 0.0
    %237 = vmatprep.mubr.f32.mxu0 0.0
    %238 = vmatmul.mubr.f32.gmra.mrb[0].mxu0 %v168
    %v239 = vpop.f32.mrb[0].mxu0
    %v240 = vadd.f32 0.0, %v239
    %v241 = vpop.f32.mrb[0].mxu0
    %242 = vmatprep.mubr.f32.mxu0 0.0
    %243 = vmatmul.mubr.f32.gmra.mrb[0].mxu0 %v171
    %v244 = vpop.f32.mrb[0].mxu0
    %v245 = vadd.f32 0.0, %v244
    %v246 = vpop.f32.mrb[0].mxu0
    %247 = vdwg.mxu0
    %248 = vxpose.xlu0.b32.start [1/16] %v76, 128
    %249 = vxpose.xlu0.b32.cont [2/16] %v77, 128
    %250 = vxpose.xlu0.b32.cont [3/16] 0.0, 128
    %251 = vxpose.xlu0.b32.cont [4/16] 0.0, 128
    %252 = vxpose.xlu0.b32.cont [5/16] 0.0, 128
    %253 = vxpose.xlu0.b32.cont [6/16] 0.0, 128
    %254 = vxpose.xlu0.b32.cont [7/16] 0.0, 128
    %255 = vxpose.xlu0.b32.cont [8/16] 0.0, 128
    %256 = vxpose.xlu0.b32.cont [9/16] 0.0, 128
    %257 = vxpose.xlu0.b32.cont [10/16] 0.0, 128
    %258 = vxpose.xlu0.b32.cont [11/16] 0.0, 128
    %259 = vxpose.xlu0.b32.cont [12/16] 0.0, 128
    %260 = vxpose.xlu0.b32.cont [13/16] 0.0, 128
    %261 = vxpose.xlu0.b32.cont [14/16] 0.0, 128
    %262 = vxpose.xlu0.b32.cont [15/16] 0.0, 128
    %263 = vxpose.xlu0.b32.end [16/16] 0.0, 128
    %v264 = vpop.trf.xlu0
    %v265 = vpop.trf.xlu0
    %v266 = vpop.trf.xlu0
    %v267 = vpop.trf.xlu0
    %v268 = vpop.trf.xlu0
    %v269 = vpop.trf.xlu0
    %v270 = vpop.trf.xlu0
    %v271 = vpop.trf.xlu0
    %v272 = vpop.trf.xlu0
    %v273 = vpop.trf.xlu0
    %v274 = vpop.trf.xlu0
    %v275 = vpop.trf.xlu0
    %v276 = vpop.trf.xlu0
    %v277 = vpop.trf.xlu0
    %v278 = vpop.trf.xlu0
    %v279 = vpop.trf.xlu0
    %v281 = vsel %vm166, %v264, 0
    %v284 = vsel %vm166, %v265, 0
    %286 = vmatprep.subr.mxu0 0.0
    %287 = vmatpush1.msra.mxu0 %v158
    %288 = vmatprep.subr.mxu0 0.0
    %289 = vmatpush1.msra.mxu0 %v163
    %290 = vmatprep.subr.mxu0 0.0
    %291 = vmatpush1.msra.mxu0 0.0
    %292 = vmatprep.subr.mxu0 0.0
    %293 = vmatpush1.msra.mxu0 0.0
    %294 = vmatprep.subr.mxu0 0.0
    %295 = vmatpush1.msra.mxu0 0.0
    %296 = vmatprep.subr.mxu0 0.0
    %297 = vmatpush1.msra.mxu0 0.0
    %298 = vmatprep.subr.mxu0 0.0
    %299 = vmatpush1.msra.mxu0 0.0
    %300 = vmatprep.subr.mxu0 0.0
    %301 = vmatpush1.msra.mxu0 0.0
    %302 = vmatprep.subr.mxu0 0.0
    %303 = vmatpush1.msra.mxu0 0.0
    %304 = vmatprep.subr.mxu0 0.0
    %305 = vmatpush1.msra.mxu0 0.0
    %306 = vmatprep.subr.mxu0 0.0
    %307 = vmatpush1.msra.mxu0 0.0
    %308 = vmatprep.subr.mxu0 0.0
    %309 = vmatpush1.msra.mxu0 0.0
    %310 = vmatprep.subr.mxu0 0.0
    %311 = vmatpush1.msra.mxu0 0.0
    %312 = vmatprep.subr.mxu0 0.0
    %313 = vmatpush1.msra.mxu0 0.0
    %314 = vmatprep.subr.mxu0 0.0
    %315 = vmatpush1.msra.mxu0 0.0
    %316 = vmatprep.subr.mxu0 0.0
    %317 = vmatpush1.msra.mxu0 0.0
    %318 = vmatprep.subr.mxu0 0.0
    %319 = vmatpush1.msra.mxu0 0.0
    %320 = vmatprep.subr.mxu0 0.0
    %321 = vmatpush1.msra.mxu0 0.0
    %322 = vmatprep.subr.mxu0 0.0
    %323 = vmatpush1.msra.mxu0 0.0
    %324 = vmatprep.subr.mxu0 0.0
    %325 = vmatpush1.msra.mxu0 0.0
    %326 = vmatprep.subr.mxu0 0.0
    %327 = vmatpush1.msra.mxu0 0.0
    %328 = vmatprep.subr.mxu0 0.0
    %329 = vmatpush1.msra.mxu0 0.0
    %330 = vmatprep.subr.mxu0 0.0
    %331 = vmatpush1.msra.mxu0 0.0
    %332 = vmatprep.subr.mxu0 0.0
    %333 = vmatpush1.msra.mxu0 0.0
    %334 = vmatprep.subr.mxu0 0.0
    %335 = vmatpush1.msra.mxu0 0.0
    %336 = vmatprep.subr.mxu0 0.0
    %337 = vmatpush1.msra.mxu0 0.0
    %338 = vmatprep.subr.mxu0 0.0
    %339 = vmatpush1.msra.mxu0 0.0
    %340 = vmatprep.subr.mxu0 0.0
    %341 = vmatpush1.msra.mxu0 0.0
    %342 = vmatprep.subr.mxu0 0.0
    %343 = vmatpush1.msra.mxu0 0.0
    %344 = vmatprep.subr.mxu0 0.0
    %345 = vmatpush1.msra.mxu0 0.0
    %346 = vmatprep.subr.mxu0 0.0
    %347 = vmatpush1.msra.mxu0 0.0
    %348 = vmatprep.subr.mxu0 0.0
    %349 = vmatpush1.msra.mxu0 0.0
    %350 = vmatprep.mubr.f32.mxu0 0.0
    %351 = vmatmul.mubr.f32.gmra.mrb[0].mxu0 %v281
    %v352 = vpop.f32.mrb[0].mxu0
    %v353 = vadd.f32 0.0, %v352
    %v354 = vpop.f32.mrb[0].mxu0
    %355 = vmatprep.mubr.f32.mxu0 0.0
    %356 = vmatmul.mubr.f32.gmra.mrb[0].mxu0 %v284
    %v357 = vpop.f32.mrb[0].mxu0
    %v358 = vadd.f32 0.0, %v357
    %v359 = vpop.f32.mrb[0].mxu0
    %360 = vdwg.mxu0
    %v361 = vtanh.pop %v240
    %v362 = vtanh.pop %v245
    %v363 = vtanh.pop %v353
    %v364 = vtanh.pop %v358
    %367 = vrot.lane.b32.xlu0 %v363, 32
    %v368 = vpop.permute.xlu0 %367
    %369 = vrot.lane.b32.xlu0 %v364, 32
    %v370 = vpop.permute.xlu0 %369
    %v373 = vsel %vm84, %v361, %v368
    %v374 = vsel %vm84, %v362, %v370
    %vm375 = vcmask 523264
    %376 = vst.msk [vmem:[#allocation10] sm:$0xff] %vm375, %v373
    %377 = vst.msk [vmem:[#allocation10 + $0x8] sm:$0xff] %vm375, %v374
    %v378 = vld [vmem:[#allocation8] sm:$0xff]
    %v379 = vld [vmem:[#allocation8 + $0x8] sm:$0xff]
    %v380 = vld [vmem:[#allocation8 + $0x10] sm:$0xff]
    %v381 = vld [vmem:[#allocation8 + $0x18] sm:$0xff]
    %v383 = vsel %vm84, %v361, 0
    %v386 = vsel %vm84, %v362, 0
    %388 = vmatprep.subr.mxu0 0.0
    %389 = vmatpush1.msra.mxu0 %v378
    %390 = vmatprep.subr.mxu0 0.0
    %391 = vmatpush1.msra.mxu0 %v379
    %392 = vmatprep.subr.mxu0 0.0
    %393 = vmatpush1.msra.mxu0 %v380
    %394 = vmatprep.subr.mxu0 0.0
    %395 = vmatpush1.msra.mxu0 %v381
    %396 = vmatprep.subr.mxu0 0.0
    %397 = vmatpush1.msra.mxu0 0.0
    %398 = vmatprep.subr.mxu0 0.0
    %399 = vmatpush1.msra.mxu0 0.0
    %400 = vmatprep.subr.mxu0 0.0
    %401 = vmatpush1.msra.mxu0 0.0
    %402 = vmatprep.subr.mxu0 0.0
    %403 = vmatpush1.msra.mxu0 0.0
    %404 = vmatprep.subr.mxu0 0.0
    %405 = vmatpush1.msra.mxu0 0.0
    %406 = vmatprep.subr.mxu0 0.0
    %407 = vmatpush1.msra.mxu0 0.0
    %408 = vmatprep.subr.mxu0 0.0
    %409 = vmatpush1.msra.mxu0 0.0
    %410 = vmatprep.subr.mxu0 0.0
    %411 = vmatpush1.msra.mxu0 0.0
    %412 = vmatprep.subr.mxu0 0.0
    %413 = vmatpush1.msra.mxu0 0.0
    %414 = vmatprep.subr.mxu0 0.0
    %415 = vmatpush1.msra.mxu0 0.0
    %416 = vmatprep.subr.mxu0 0.0
    %417 = vmatpush1.msra.mxu0 0.0
    %418 = vmatprep.subr.mxu0 0.0
    %419 = vmatpush1.msra.mxu0 0.0
    %420 = vmatprep.subr.mxu0 0.0
    %421 = vmatpush1.msra.mxu0 0.0
    %422 = vmatprep.subr.mxu0 0.0
    %423 = vmatpush1.msra.mxu0 0.0
    %424 = vmatprep.subr.mxu0 0.0
    %425 = vmatpush1.msra.mxu0 0.0
    %426 = vmatprep.subr.mxu0 0.0
    %427 = vmatpush1.msra.mxu0 0.0
    %428 = vmatprep.subr.mxu0 0.0
    %429 = vmatpush1.msra.mxu0 0.0
    %430 = vmatprep.subr.mxu0 0.0
    %431 = vmatpush1.msra.mxu0 0.0
    %432 = vmatprep.subr.mxu0 0.0
    %433 = vmatpush1.msra.mxu0 0.0
    %434 = vmatprep.subr.mxu0 0.0
    %435 = vmatpush1.msra.mxu0 0.0
    %436 = vmatprep.subr.mxu0 0.0
    %437 = vmatpush1.msra.mxu0 0.0
    %438 = vmatprep.subr.mxu0 0.0
    %439 = vmatpush1.msra.mxu0 0.0
    %440 = vmatprep.subr.mxu0 0.0
    %441 = vmatpush1.msra.mxu0 0.0
    %442 = vmatprep.subr.mxu0 0.0
    %443 = vmatpush1.msra.mxu0 0.0
    %444 = vmatprep.subr.mxu0 0.0
    %445 = vmatpush1.msra.mxu0 0.0
    %446 = vmatprep.subr.mxu0 0.0
    %447 = vmatpush1.msra.mxu0 0.0
    %448 = vmatprep.subr.mxu0 0.0
    %449 = vmatpush1.msra.mxu0 0.0
    %450 = vmatprep.subr.mxu0 0.0
    %451 = vmatpush1.msra.mxu0 0.0
    %452 = vmatprep.mubr.f32.mxu0 0.0
    %453 = vmatmul.mubr.f32.gmra.mrb[0].mxu0 %v383
    %v454 = vpop.f32.mrb[0].mxu0
    %v455 = vadd.f32 0.0, %v454
    %v456 = vpop.f32.mrb[0].mxu0
    %457 = vmatprep.mubr.f32.mxu0 0.0
    %458 = vmatmul.mubr.f32.gmra.mrb[0].mxu0 %v386
    %v459 = vpop.f32.mrb[0].mxu0
    %v460 = vadd.f32 0.0, %v459
    %v461 = vpop.f32.mrb[0].mxu0
    %462 = vdwg.mxu0
    %v463 = vsel %vm84, %v363, 0
    %v465 = vsel %vm84, %v364, 0
    %467 = vmatprep.subr.mxu0 0.0
    %468 = vmatpush1.msra.mxu0 %v378
    %469 = vmatprep.subr.mxu0 0.0
    %470 = vmatpush1.msra.mxu0 %v379
    %471 = vmatprep.subr.mxu0 0.0
    %472 = vmatpush1.msra.mxu0 %v380
    %473 = vmatprep.subr.mxu0 0.0
    %474 = vmatpush1.msra.mxu0 %v381
    %475 = vmatprep.subr.mxu0 0.0
    %476 = vmatpush1.msra.mxu0 0.0
    %477 = vmatprep.subr.mxu0 0.0
    %478 = vmatpush1.msra.mxu0 0.0
    %479 = vmatprep.subr.mxu0 0.0
    %480 = vmatpush1.msra.mxu0 0.0
    %481 = vmatprep.subr.mxu0 0.0
    %482 = vmatpush1.msra.mxu0 0.0
    %483 = vmatprep.subr.mxu0 0.0
    %484 = vmatpush1.msra.mxu0 0.0
    %485 = vmatprep.subr.mxu0 0.0
    %486 = vmatpush1.msra.mxu0 0.0
    %487 = vmatprep.subr.mxu0 0.0
    %488 = vmatpush1.msra.mxu0 0.0
    %489 = vmatprep.subr.mxu0 0.0
    %490 = vmatpush1.msra.mxu0 0.0
    %491 = vmatprep.subr.mxu0 0.0
    %492 = vmatpush1.msra.mxu0 0.0
    %493 = vmatprep.subr.mxu0 0.0
    %494 = vmatpush1.msra.mxu0 0.0
    %495 = vmatprep.subr.mxu0 0.0
    %496 = vmatpush1.msra.mxu0 0.0
    %497 = vmatprep.subr.mxu0 0.0
    %498 = vmatpush1.msra.mxu0 0.0
    %499 = vmatprep.subr.mxu0 0.0
    %500 = vmatpush1.msra.mxu0 0.0
    %501 = vmatprep.subr.mxu0 0.0
    %502 = vmatpush1.msra.mxu0 0.0
    %503 = vmatprep.subr.mxu0 0.0
    %504 = vmatpush1.msra.mxu0 0.0
    %505 = vmatprep.subr.mxu0 0.0
    %506 = vmatpush1.msra.mxu0 0.0
    %507 = vmatprep.subr.mxu0 0.0
    %508 = vmatpush1.msra.mxu0 0.0
    %509 = vmatprep.subr.mxu0 0.0
    %510 = vmatpush1.msra.mxu0 0.0
    %511 = vmatprep.subr.mxu0 0.0
    %512 = vmatpush1.msra.mxu0 0.0
    %513 = vmatprep.subr.mxu0 0.0
    %514 = vmatpush1.msra.mxu0 0.0
    %515 = vmatprep.subr.mxu0 0.0
    %516 = vmatpush1.msra.mxu0 0.0
    %517 = vmatprep.subr.mxu0 0.0
    %518 = vmatpush1.msra.mxu0 0.0
    %519 = vmatprep.subr.mxu0 0.0
    %520 = vmatpush1.msra.mxu0 0.0
    %521 = vmatprep.subr.mxu0 0.0
    %522 = vmatpush1.msra.mxu0 0.0
    %523 = vmatprep.subr.mxu0 0.0
    %524 = vmatpush1.msra.mxu0 0.0
    %525 = vmatprep.subr.mxu0 0.0
    %526 = vmatpush1.msra.mxu0 0.0
    %527 = vmatprep.subr.mxu0 0.0
    %528 = vmatpush1.msra.mxu0 0.0
    %529 = vmatprep.subr.mxu0 0.0
    %530 = vmatpush1.msra.mxu0 0.0
    %531 = vmatprep.mubr.f32.mxu0 0.0
    %532 = vmatmul.mubr.f32.gmra.mrb[0].mxu0 %v463
    %v533 = vpop.f32.mrb[0].mxu0
    %v534 = vadd.f32 0.0, %v533
    %v535 = vpop.f32.mrb[0].mxu0
    %536 = vmatprep.mubr.f32.mxu0 0.0
    %537 = vmatmul.mubr.f32.gmra.mrb[0].mxu0 %v465
    %v538 = vpop.f32.mrb[0].mxu0
    %v539 = vadd.f32 0.0, %v538
    %v540 = vpop.f32.mrb[0].mxu0
    %541 = vdwg.mxu0
    %542 = vmatprep.subr.mxu0 0.0
    %543 = vmatpush1.msra.mxu0 %v455
    %544 = vmatprep.subr.mxu0 0.0
    %545 = vmatpush1.msra.mxu0 %v460
    %546 = vmatprep.subr.mxu0 0.0
    %547 = vmatpush1.msra.mxu0 0.0
    %548 = vmatprep.subr.mxu0 0.0
    %549 = vmatpush1.msra.mxu0 0.0
    %550 = vmatprep.subr.mxu0 0.0
    %551 = vmatpush1.msra.mxu0 0.0
    %552 = vmatprep.subr.mxu0 0.0
    %553 = vmatpush1.msra.mxu0 0.0
    %554 = vmatprep.subr.mxu0 0.0
    %555 = vmatpush1.msra.mxu0 0.0
    %556 = vmatprep.subr.mxu0 0.0
    %557 = vmatpush1.msra.mxu0 0.0
    %558 = vmatprep.subr.mxu0 0.0
    %559 = vmatpush1.msra.mxu0 0.0
    %560 = vmatprep.subr.mxu0 0.0
    %561 = vmatpush1.msra.mxu0 0.0
    %562 = vmatprep.subr.mxu0 0.0
    %563 = vmatpush1.msra.mxu0 0.0
    %564 = vmatprep.subr.mxu0 0.0
    %565 = vmatpush1.msra.mxu0 0.0
    %566 = vmatprep.subr.mxu0 0.0
    %567 = vmatpush1.msra.mxu0 0.0
    %568 = vmatprep.subr.mxu0 0.0
    %569 = vmatpush1.msra.mxu0 0.0
    %570 = vmatprep.subr.mxu0 0.0
    %571 = vmatpush1.msra.mxu0 0.0
    %572 = vmatprep.subr.mxu0 0.0
    %573 = vmatpush1.msra.mxu0 0.0
    %574 = vmatprep.subr.mxu0 0.0
    %575 = vmatpush1.msra.mxu0 0.0
    %576 = vmatprep.subr.mxu0 0.0
    %577 = vmatpush1.msra.mxu0 0.0
    %578 = vmatprep.subr.mxu0 0.0
    %579 = vmatpush1.msra.mxu0 0.0
    %580 = vmatprep.subr.mxu0 0.0
    %581 = vmatpush1.msra.mxu0 0.0
    %582 = vmatprep.subr.mxu0 0.0
    %583 = vmatpush1.msra.mxu0 0.0
    %584 = vmatprep.subr.mxu0 0.0
    %585 = vmatpush1.msra.mxu0 0.0
    %586 = vmatprep.subr.mxu0 0.0
    %587 = vmatpush1.msra.mxu0 0.0
    %588 = vmatprep.subr.mxu0 0.0
    %589 = vmatpush1.msra.mxu0 0.0
    %590 = vmatprep.subr.mxu0 0.0
    %591 = vmatpush1.msra.mxu0 0.0
    %592 = vmatprep.subr.mxu0 0.0
    %593 = vmatpush1.msra.mxu0 0.0
    %594 = vmatprep.subr.mxu0 0.0
    %595 = vmatpush1.msra.mxu0 0.0
    %596 = vmatprep.subr.mxu0 0.0
    %597 = vmatpush1.msra.mxu0 0.0
    %598 = vmatprep.subr.mxu0 0.0
    %599 = vmatpush1.msra.mxu0 0.0
    %600 = vmatprep.subr.mxu0 0.0
    %601 = vmatpush1.msra.mxu0 0.0
    %602 = vmatprep.subr.mxu0 0.0
    %603 = vmatpush1.msra.mxu0 0.0
    %604 = vmatprep.subr.mxu0 0.0
    %605 = vmatpush1.msra.mxu0 0.0
    %606 = vmatprep.mubr.f32.mxu0 0.0
    %607 = vmatmul.mubr.f32.gmra.mrb[0].mxu0 %v168
    %v608 = vpop.f32.mrb[0].mxu0
    %v609 = vadd.f32 0.0, %v608
    %v610 = vpop.f32.mrb[0].mxu0
    %611 = vmatprep.mubr.f32.mxu0 0.0
    %612 = vmatmul.mubr.f32.gmra.mrb[0].mxu0 %v171
    %v613 = vpop.f32.mrb[0].mxu0
    %v614 = vadd.f32 0.0, %v613
    %v615 = vpop.f32.mrb[0].mxu0
    %616 = vdwg.mxu0
    %617 = vmatprep.subr.mxu0 0.0
    %618 = vmatpush1.msra.mxu0 %v534
    %619 = vmatprep.subr.mxu0 0.0
    %620 = vmatpush1.msra.mxu0 %v539
    %621 = vmatprep.subr.mxu0 0.0
    %622 = vmatpush1.msra.mxu0 0.0
    %623 = vmatprep.subr.mxu0 0.0
    %624 = vmatpush1.msra.mxu0 0.0
    %625 = vmatprep.subr.mxu0 0.0
    %626 = vmatpush1.msra.mxu0 0.0
    %627 = vmatprep.subr.mxu0 0.0
    %628 = vmatpush1.msra.mxu0 0.0
    %629 = vmatprep.subr.mxu0 0.0
    %630 = vmatpush1.msra.mxu0 0.0
    %631 = vmatprep.subr.mxu0 0.0
    %632 = vmatpush1.msra.mxu0 0.0
    %633 = vmatprep.subr.mxu0 0.0
    %634 = vmatpush1.msra.mxu0 0.0
    %635 = vmatprep.subr.mxu0 0.0
    %636 = vmatpush1.msra.mxu0 0.0
    %637 = vmatprep.subr.mxu0 0.0
    %638 = vmatpush1.msra.mxu0 0.0
    %639 = vmatprep.subr.mxu0 0.0
    %640 = vmatpush1.msra.mxu0 0.0
    %641 = vmatprep.subr.mxu0 0.0
    %642 = vmatpush1.msra.mxu0 0.0
    %643 = vmatprep.subr.mxu0 0.0
    %644 = vmatpush1.msra.mxu0 0.0
    %645 = vmatprep.subr.mxu0 0.0
    %646 = vmatpush1.msra.mxu0 0.0
    %647 = vmatprep.subr.mxu0 0.0
    %648 = vmatpush1.msra.mxu0 0.0
    %649 = vmatprep.subr.mxu0 0.0
    %650 = vmatpush1.msra.mxu0 0.0
    %651 = vmatprep.subr.mxu0 0.0
    %652 = vmatpush1.msra.mxu0 0.0
    %653 = vmatprep.subr.mxu0 0.0
    %654 = vmatpush1.msra.mxu0 0.0
    %655 = vmatprep.subr.mxu0 0.0
    %656 = vmatpush1.msra.mxu0 0.0
    %657 = vmatprep.subr.mxu0 0.0
    %658 = vmatpush1.msra.mxu0 0.0
    %659 = vmatprep.subr.mxu0 0.0
    %660 = vmatpush1.msra.mxu0 0.0
    %661 = vmatprep.subr.mxu0 0.0
    %662 = vmatpush1.msra.mxu0 0.0
    %663 = vmatprep.subr.mxu0 0.0
    %664 = vmatpush1.msra.mxu0 0.0
    %665 = vmatprep.subr.mxu0 0.0
    %666 = vmatpush1.msra.mxu0 0.0
    %667 = vmatprep.subr.mxu0 0.0
    %668 = vmatpush1.msra.mxu0 0.0
    %669 = vmatprep.subr.mxu0 0.0
    %670 = vmatpush1.msra.mxu0 0.0
    %671 = vmatprep.subr.mxu0 0.0
    %672 = vmatpush1.msra.mxu0 0.0
    %673 = vmatprep.subr.mxu0 0.0
    %674 = vmatpush1.msra.mxu0 0.0
    %675 = vmatprep.subr.mxu0 0.0
    %676 = vmatpush1.msra.mxu0 0.0
    %677 = vmatprep.subr.mxu0 0.0
    %678 = vmatpush1.msra.mxu0 0.0
    %679 = vmatprep.subr.mxu0 0.0
    %680 = vmatpush1.msra.mxu0 0.0
    %681 = vmatprep.mubr.f32.mxu0 0.0
    %682 = vmatmul.mubr.f32.gmra.mrb[0].mxu0 %v281
    %v683 = vpop.f32.mrb[0].mxu0
    %v684 = vadd.f32 0.0, %v683
    %v685 = vpop.f32.mrb[0].mxu0
    %686 = vmatprep.mubr.f32.mxu0 0.0
    %687 = vmatmul.mubr.f32.gmra.mrb[0].mxu0 %v284
    %v688 = vpop.f32.mrb[0].mxu0
    %v689 = vadd.f32 0.0, %v688
    %v690 = vpop.f32.mrb[0].mxu0
    %691 = vdwg.mxu0
    %694 = vrot.lane.b32.xlu0 %v684, 32
    %v695 = vpop.permute.xlu0 %694
    %696 = vrot.lane.b32.xlu0 %v689, 32
    %v697 = vpop.permute.xlu0 %696
    %v700 = vsel %vm84, %v609, %v695
    %v701 = vsel %vm84, %v614, %v697
    %702 = vst.msk [vmem:[#allocation11] sm:$0xff] %vm375, %v700
    %703 = vst.msk [vmem:[#allocation11 + $0x8] sm:$0xff] %vm375, %v701
    // Predicated region
    $region34: #{tpu_custom_call.1} parent=1 // pred_check
      _
    $region35: #{tpu_custom_call.1} parent=1 // pred_check_branch
      %705 = sbr.rel (0) target = $region37
    $region36: #{tpu_custom_call.1} parent=1 // pred_region
      %s707 = ssub.s32 256, 256
      %708 = vsyncadd [#allocation4], %s707
      %s709 = sshll.u32 [#allocation10], 4
      %s710 = int_to_ptr.vmem [resolvable:$true] %s709
      %715 = dma.vmem_to_hbm [thread:$0]  %s710, 256, %s4, [#allocation4], 128, 128, 8
    $region37: #{tpu_custom_call.1} parent=1 // pred_fallthru
      _
    // Predicated region
    $region38: #{tpu_custom_call.1} parent=1 // pred_check
      _
    $region39: #{tpu_custom_call.1} parent=1 // pred_check_branch
      %717 = sbr.rel (0) target = $region41
    $region40: #{tpu_custom_call.1} parent=1 // pred_region
      %s719 = ssub.s32 256, 256
      %720 = vsyncadd [#allocation12], %s719
      %s721 = sshll.u32 [#allocation11], 4
      %s722 = int_to_ptr.vmem [resolvable:$true] %s721
      %727 = dma.vmem_to_hbm [thread:$0]  %s722, 256, %s5, [#allocation12], 128, 128, 8
    $region41: #{tpu_custom_call.1} parent=1 // pred_fallthru
      _
    // Predicated region
    $region42: #{tpu_custom_call.1} parent=1 // pred_check
      _
    $region43: #{tpu_custom_call.1} parent=1 // pred_check_branch
      %729 = sbr.rel (0) target = $region45
    $region44: #{tpu_custom_call.1} parent=1 // pred_region
      %730 = dma.done [#allocation4], 256
    $region45: #{tpu_custom_call.1} parent=1 // pred_fallthru
      _
    // Predicated region
    $region46: #{tpu_custom_call.1} parent=1 // pred_check
      _
    $region47: #{tpu_custom_call.1} parent=1 // pred_check_branch
      %732 = sbr.rel (0) target = $region49
    $region48: #{tpu_custom_call.1} parent=1 // pred_region
      %733 = dma.done [#allocation12], 256
    $region49: #{tpu_custom_call.1} parent=1 // pred_fallthru
      _
    %734 = vsyncpa [#allocation3], 1
    %735 = vsyncpa [#allocation6], 1
    %736 = vsyncpa [#allocation9], 1
    %737 = vsyncpa [#allocation4], 1
    %738 = vsyncpa [#allocation12], 1

</llo_original>
